<compile_context>
chip_gen: v7x
topology: tpu7x:2x2x1
jax: 0.10.0
libtpu: 0.0.40
codegen_flags: <defaults>
</compile_context>

<pallas_src>
import functools

import jax
import jax.numpy as jnp
from jax.experimental import pallas as pl
from jax.experimental.pallas import tpu as pltpu


def _ce_kernel(yp_ref, yt_ref, out_ref, *, n_total, block_rows, sub_rows):
    """One grid step: (block_rows, C) rows -> one scalar partial loss sum."""
    i = pl.program_id(0)
    n_sub = block_rows // sub_rows  # static python int, sub_rows divides block_rows

    def _chunk_loss_sum(r0):
        # Logits upcast to f32 in-kernel (no wrapper-side astype / extra HBM pass).
        yp = yp_ref[pl.ds(r0, sub_rows), :].astype(jnp.float32)   # (sub, C)
        # argmax(y_true) runs in y_true's NATIVE dtype (exact-equality compare,
        # first-max-wins tie break => identical to torch.argmax semantics).
        yt = yt_ref[pl.ds(r0, sub_rows), :]                        # (sub, C)
        sub, c = yp.shape

        col = jax.lax.broadcasted_iota(jnp.int32, (sub, c), 1)
        row_max = jnp.max(yt, axis=1, keepdims=True)
        cand = jnp.where(yt == row_max, col, jnp.int32(c))   # non-max -> sentinel C
        tgt = jnp.min(cand, axis=1, keepdims=True)            # (sub, 1) first max idx

        # Cross entropy: logsumexp(y_pred) - y_pred[target] (numerically stable).
        m = jnp.max(yp, axis=1, keepdims=True)
        lse = jnp.log(jnp.sum(jnp.exp(yp - m), axis=1, keepdims=True)) + m
        # Reuse `cand` for the selection mask (cand == tgt only at the target col)
        # so `col`'s live range ends after cand is built.
        sel = jnp.sum(jnp.where(cand == tgt, yp, 0.0), axis=1, keepdims=True)
        losses = lse - sel                                     # (sub, 1)

        # Mask padded rows of the ragged final tile (contribute exactly 0, NaN-safe).
        row_ids = (i * block_rows + r0
                   + jax.lax.broadcasted_iota(jnp.int32, (sub, 1), 0))
        masked = jnp.where(row_ids < n_total, losses, 0.0)
        return jnp.sum(masked, keepdims=True)                  # (1, 1)

    if n_sub == 1:
        total = _chunk_loss_sum(0)
    else:
        # Sub-chunk the compute so f32 temporaries stay at (sub_rows, C) while the
        # DMA tile stays large.  fori_loop (not a python loop) bounds live ranges.
        def body(j, acc):
            r0 = pl.multiple_of(j * sub_rows, 8)
            return acc + _chunk_loss_sum(r0)

        total = jax.lax.fori_loop(0, n_sub, body, jnp.zeros((1, 1), jnp.float32))

    # Lane-dense, (8,128)-aligned partial-sum slab: one unmasked store per tile.
    out_ref[...] = jnp.broadcast_to(total.reshape(1, 1, 1), out_ref.shape)


def cross_entropy_loss(y_pred, y_true, *, block_rows=None):
    """Equivalent of CrossEntropyLoss.forward(y_pred, y_true) from the PyTorch module.

    y_pred: (N, C) float logits
    y_true: (N, C) float scores/probs; class index = argmax over dim 1
    returns: scalar float32 mean cross-entropy loss

    block_rows is a hint; it is rounded to satisfy TPU sublane/tiling rules.
    """
    n, c = y_pred.shape
    assert y_true.shape == (n, c)

    # Lane-padded class width actually resident in VMEM (128-lane vregs).
    c_pad = pl.cdiv(c, 128) * 128
    in_itemsize = y_pred.dtype.itemsize + y_true.dtype.itemsize  # per element streamed

    # Generation-aware VMEM budget (v7x: 64 MiB/TC, v5e/v6e: 128 MiB).
    try:
        vmem_cap = int(pltpu.get_tpu_info().vmem_capacity_bytes)
    except Exception:
        vmem_cap = 64 * 1024 * 1024  # conservative (v7x-sized) fallback

    # --- inner sub-chunk: bounds the f32 temporary footprint ---
    n_f32_temps = 6  # iota/cand/yp/exp/mask intermediates at sub-chunk granularity
    temp_budget = min(8 * 1024 * 1024, vmem_cap // 8)
    sub_target = temp_budget // (n_f32_temps * c_pad * 4)
    sub_target = max(8, min(256, (sub_target // 8) * 8))
    temp_bytes = n_f32_temps * sub_target * c_pad * 4

    # --- DMA tile: sized from the input dtypes (double-buffered blocks) ---
    io_budget = int(0.40 * vmem_cap)
    per_row_io = 2 * in_itemsize * c_pad  # 2x: pipeline double buffers
    if block_rows is None:
        avail = max(io_budget - temp_bytes, 64 * per_row_io)
        block_rows = avail // per_row_io
    block_rows = max(8, min(int(block_rows), 16384))
    block_rows = (block_rows // 8) * 8  # sublane rule for user-supplied values too

    if n <= 8:
        tn = n  # block equals full array dim -> always layout-legal
    else:
        tn = min(block_rows, (n // 8) * 8)
        # Guarantee >= 2 grid steps for non-trivial batches so the "parallel"
        # axis actually shards across v7x's two TensorCores.
        if pl.cdiv(n, tn) == 1 and n >= 64:
            tn = pl.cdiv(pl.cdiv(n, 2), 8) * 8

    # Make the sub-chunk divide the tile (dynamic slices never run past the block).
    if tn > sub_target:
        tn = (tn // sub_target) * sub_target
        sub_rows = sub_target
    else:
        sub_rows = tn

    num_tiles = pl.cdiv(n, tn)

    # VMEM limit with headroom (never exceeds ~70% of physical VMEM).
    est_vmem = (2 * tn * c_pad * in_itemsize            # double-buffered input blocks
                + n_f32_temps * sub_rows * c_pad * 4    # in-kernel temporaries
                + (1 << 20))
    vmem_limit = int(min(int(0.70 * vmem_cap),
                         max(16 * 1024 * 1024, est_vmem + est_vmem // 2)))

    kernel = functools.partial(_ce_kernel, n_total=n, block_rows=tn,
                               sub_rows=sub_rows)
    partial_sums = pl.pallas_call(
        kernel,
        out_shape=jax.ShapeDtypeStruct((num_tiles, 8, 128), jnp.float32),
        grid_spec=pltpu.PrefetchScalarGridSpec(
            num_scalar_prefetch=0,
            grid=(num_tiles,),
            in_specs=[
                pl.BlockSpec((tn, c), lambda i: (i, 0)),
                pl.BlockSpec((tn, c), lambda i: (i, 0)),
            ],
            out_specs=pl.BlockSpec((1, 8, 128), lambda i: (i, 0, 0)),
        ),
        compiler_params=pltpu.CompilerParams(
            dimension_semantics=("parallel",),
            vmem_limit_bytes=vmem_limit,
        ),
        cost_estimate=pl.CostEstimate(
            flops=8 * n * c,
            transcendentals=n * c,
            bytes_accessed=n * c * in_itemsize + num_tiles * 8 * 128 * 4,
        ),
    )(y_pred, y_true)

    # Tiny final reduction over num_tiles scalars; divide by the TRUE batch size.
    return jnp.sum(partial_sums[:, 0, 0]) / n


def _reference(y_pred, y_true):
    # Pure-JAX reference mirroring torch semantics.
    tgt = jnp.argmax(y_true, axis=1)
    logp = jax.nn.log_softmax(y_pred.astype(jnp.float32), axis=1)
    return -jnp.mean(jnp.take_along_axis(logp, tgt[:, None], axis=1))


if __name__ == "__main__":
    key = jax.random.PRNGKey(0)
    ks = jax.random.split(key, 8)

    # 1) Small case (single tile, single sub-chunk): N=8, C=32.
    n1, c1 = 8, 32
    yp1 = jax.random.normal(ks[0], (n1, c1), dtype=jnp.float32)
    yt1 = jax.random.uniform(ks[1], (n1, c1), dtype=jnp.float32)
    loss1 = cross_entropy_loss(yp1, yt1)
    jax.block_until_ready(loss1)
    ref1 = _reference(yp1, yt1)
    assert jnp.allclose(loss1, ref1, atol=1e-4, rtol=1e-5), (loss1, ref1)

    # 2) Multi-tile, ragged final block, lane-padded C, user-supplied block_rows.
    n2, c2 = 300, 160
    yp2 = jax.random.normal(ks[2], (n2, c2), dtype=jnp.float32)
    yt2 = jax.random.uniform(ks[3], (n2, c2), dtype=jnp.float32)
    loss2 = cross_entropy_loss(yp2, yt2, block_rows=128)
    jax.block_until_ready(loss2)
    ref2 = _reference(yp2, yt2)
    assert jnp.allclose(loss2, ref2, atol=1e-4, rtol=1e-5), (loss2, ref2)

    # 3) Auto-sized tiles: exercises the >=2-grid-step split and the in-kernel
    #    sub-chunk fori_loop (tn=512, sub_rows=256 -> 2 inner chunks).
    n3, c3 = 1024, 64
    yp3 = jax.random.normal(ks[4], (n3, c3), dtype=jnp.float32)
    yt3 = jax.random.uniform(ks[5], (n3, c3), dtype=jnp.float32)
    loss3 = cross_entropy_loss(yp3, yt3)
    jax.block_until_ready(loss3)
    ref3 = _reference(yp3, yt3)
    assert jnp.allclose(loss3, ref3, atol=1e-4, rtol=1e-5), (loss3, ref3)

    # 4) bf16 inputs: native-dtype argmax path + in-kernel f32 upcast of logits.
    n4, c4 = 64, 48
    yp4 = jax.random.normal(ks[6], (n4, c4), dtype=jnp.bfloat16)
    yt4 = jax.random.uniform(ks[7], (n4, c4), dtype=jnp.bfloat16)
    loss4 = cross_entropy_loss(yp4, yt4)
    jax.block_until_ready(loss4)
    ref4 = _reference(yp4, yt4)
    assert jnp.allclose(loss4, ref4, atol=2e-3, rtol=1e-3), (loss4, ref4)

    print("KERNEL_OK")
</pallas_src>

<mosaic_0001>
module attributes {stable_mosaic.version = 11 : i64} {
  func.func @_ce_kernel(%arg0: i32, %arg1: memref<8x32xf32, #tpu.memory_space<vmem>>, %arg2: memref<8x32xf32, #tpu.memory_space<vmem>>, %arg3: memref<1x8x128xf32, #tpu.memory_space<vmem>>) attributes {dimension_semantics = [#tpu.dimension_semantics<parallel>], iteration_bounds = array<i64: 1>, scalar_prefetch = 0 : i64, scratch_operands = 0 : i64, tpu.core_type = #tpu.core_type<tc>, window_params = [{transform_indices = @transform_0, window_bounds = array<i64: 8, 32>}, {transform_indices = @transform_1, window_bounds = array<i64: 8, 32>}, {transform_indices = @transform_2, window_bounds = array<i64: 1, 8, 128>}]} {
    %c0 = arith.constant 0 : index
    %c0_0 = arith.constant 0 : index
    %0 = vector.load %arg1[%c0, %c0_0] : memref<8x32xf32, #tpu.memory_space<vmem>>, vector<8x32xf32>
    %c0_1 = arith.constant 0 : index
    %c0_2 = arith.constant 0 : index
    %1 = vector.load %arg2[%c0_1, %c0_2] : memref<8x32xf32, #tpu.memory_space<vmem>>, vector<8x32xf32>
    %2 = tpu.iota {dimensions = array<i32: 1>} : vector<8x32xi32>
    %cst = arith.constant dense<0xFF800000> : vector<8xf32>
    %3 = vector.multi_reduction <maximumf>, %1, %cst [1] : vector<8x32xf32> to vector<8xf32>
    %4 = vector.shape_cast %3 : vector<8xf32> to vector<8x1xf32>
    %5 = vector.broadcast %4 : vector<8x1xf32> to vector<8x32xf32>
    %6 = arith.cmpf oeq, %1, %5 : vector<8x32xf32>
    %c32_i32 = arith.constant 32 : i32
    %7 = vector.broadcast %c32_i32 : i32 to vector<8x32xi32>
    %8 = arith.select %6, %2, %7 : vector<8x32xi1>, vector<8x32xi32>
    %cst_3 = arith.constant dense<2147483647> : vector<8xi32>
    %9 = vector.multi_reduction <minsi>, %8, %cst_3 [1] : vector<8x32xi32> to vector<8xi32>
    %10 = vector.shape_cast %9 : vector<8xi32> to vector<8x1xi32>
    %cst_4 = arith.constant dense<0xFF800000> : vector<8xf32>
    %11 = vector.multi_reduction <maximumf>, %0, %cst_4 [1] : vector<8x32xf32> to vector<8xf32>
    %12 = vector.shape_cast %11 : vector<8xf32> to vector<8x1xf32>
    %13 = vector.broadcast %12 : vector<8x1xf32> to vector<8x32xf32>
    %14 = arith.subf %0, %13 : vector<8x32xf32>
    %15 = math.exp %14 : vector<8x32xf32>
    %cst_5 = arith.constant dense<0.000000e+00> : vector<8xf32>
    %16 = vector.multi_reduction <add>, %15, %cst_5 [1] : vector<8x32xf32> to vector<8xf32>
    %17 = vector.shape_cast %16 : vector<8xf32> to vector<8x1xf32>
    %18 = math.log %17 : vector<8x1xf32>
    %19 = arith.addf %18, %12 : vector<8x1xf32>
    %20 = vector.broadcast %10 : vector<8x1xi32> to vector<8x32xi32>
    %21 = arith.cmpi eq, %8, %20 : vector<8x32xi32>
    %cst_6 = arith.constant 0.000000e+00 : f32
    %22 = vector.broadcast %cst_6 : f32 to vector<8x32xf32>
    %23 = arith.select %21, %0, %22 : vector<8x32xi1>, vector<8x32xf32>
    %cst_7 = arith.constant dense<0.000000e+00> : vector<8xf32>
    %24 = vector.multi_reduction <add>, %23, %cst_7 [1] : vector<8x32xf32> to vector<8xf32>
    %25 = vector.shape_cast %24 : vector<8xf32> to vector<8x1xf32>
    %26 = arith.subf %19, %25 : vector<8x1xf32>
    %c8_i32 = arith.constant 8 : i32
    %27 = arith.muli %arg0, %c8_i32 : i32
    %c0_i32 = arith.constant 0 : i32
    %28 = arith.addi %27, %c0_i32 : i32
    %29 = tpu.iota {dimensions = array<i32: 0>} : vector<8x1xi32>
    %30 = vector.broadcast %28 : i32 to vector<8x1xi32>
    %31 = arith.addi %30, %29 : vector<8x1xi32>
    %c8_i32_8 = arith.constant 8 : i32
    %32 = vector.broadcast %c8_i32_8 : i32 to vector<8x1xi32>
    %33 = arith.cmpi slt, %31, %32 : vector<8x1xi32>
    %cst_9 = arith.constant 0.000000e+00 : f32
    %34 = vector.broadcast %cst_9 : f32 to vector<8x1xf32>
    %35 = arith.select %33, %26, %34 : vector<8x1xi1>, vector<8x1xf32>
    %36 = vector.shape_cast %35 : vector<8x1xf32> to vector<1x8x1xf32>
    %cst_10 = arith.constant dense<0.000000e+00> : vector<1xf32>
    %37 = vector.multi_reduction <add>, %36, %cst_10 [1, 2] : vector<1x8x1xf32> to vector<1xf32>
    %38 = vector.shape_cast %37 : vector<1xf32> to vector<1x1x1xf32>
    %39 = vector.extract %38[0, 0, 0] : f32 from vector<1x1x1xf32>
    %40 = vector.broadcast %39 : f32 to vector<1x1xf32>
    %41 = vector.shape_cast %40 : vector<1x1xf32> to vector<1x1x1xf32>
    %42 = vector.shape_cast %41 : vector<1x1x1xf32> to vector<1x1x1xf32>
    %43 = vector.broadcast %42 : vector<1x1x1xf32> to vector<1x8x128xf32>
    %c0_11 = arith.constant 0 : index
    %c0_12 = arith.constant 0 : index
    %c0_13 = arith.constant 0 : index
    %44 = vector.load %arg3[%c0_11, %c0_12, %c0_13] : memref<1x8x128xf32, #tpu.memory_space<vmem>>, vector<1x8x128xf32>
    tpu.vector_store %arg3[%c0_11, %c0_12, %c0_13], %43 {strides = array<i32>} : memref<1x8x128xf32, #tpu.memory_space<vmem>>, vector<1x8x128xf32>,
    return
  }
  func.func @transform_0(%arg0: i32) -> (i32, i32) {
    %c0_i32 = arith.constant 0 : i32
    %c0_i32_0 = arith.constant 0 : i32
    return %arg0, %c0_i32 : i32, i32
  }
  func.func @transform_1(%arg0: i32) -> (i32, i32) {
    %c0_i32 = arith.constant 0 : i32
    %c0_i32_0 = arith.constant 0 : i32
    return %arg0, %c0_i32 : i32, i32
  }
  func.func @transform_2(%arg0: i32) -> (i32, i32, i32) {
    %c0_i32 = arith.constant 0 : i32
    %c0_i32_0 = arith.constant 0 : i32
    %c0_i32_1 = arith.constant 0 : i32
    return %arg0, %c0_i32, %c0_i32_0 : i32, i32, i32
  }
}

</mosaic_0001>

<llo_original>
// kernel: tpu_custom_call.1
$region0: #{tpu_custom_call.1}
  #allocation0 [shape = 'u32[]', space=smem, size = 0x4, offset = 0x4, fixed_abs, tag = 'smem constant byte address 0x4 - core index']
  #allocation1 [shape = 'u32[144,128]{1,0:T(1,128)}', space=vmem, size = 0x12000, scoped, tag = 'internal scratch']
  %s0 = inlined_call_operand.hbm [shape: f32[8,32], index: 0, kind: input, shape index: {}]
  %s1 = inlined_call_operand.hbm [shape: f32[8,32], index: 1, kind: input, shape index: {}]
  %s2 = inlined_call_operand.hbm [shape: f32[1,8,128], index: 2, kind: output, shape index: {}]
  %s3 = sld [smem:[#allocation0]]
  $region26: #{tpu_custom_call.1} parent=0
    _
  %s5 = ssub.s32 1, %s3
  %s6 = scalar_select 0, %s5, %s3
  $region1: #{tpu_custom_call.1} parent=0
    #allocation2 [shape = 'u8[4096]{0}', space=vmem, size = 0x1000, scoped, tag = 'input window, operand 0, single buffered']
    #allocation3 [shape = 's32[1]{0}', space=sflag, size = 0x4, scoped, tag = 'scoped memory for tpu_custom_call.1']
    #allocation4 [shape = 's32[1]{0}', space=sflag, size = 0x4, scoped, tag = 'scoped memory for tpu_custom_call.1']
    #allocation5 [shape = 'u8[4096]{0}', space=vmem, size = 0x1000, scoped, tag = 'input window, operand 1, single buffered']
    #allocation6 [shape = 's32[1]{0}', space=sflag, size = 0x4, scoped, tag = 'scoped memory for tpu_custom_call.1']
    #allocation7 [shape = 'u8[4096]{0}', space=vmem, size = 0x1000, scoped, tag = 'output window, operand 0, single buffered']
    %7 = vsyncpa [#allocation3], 0
    %8 = vsyncpa [#allocation6], 0
    %9 = vsyncpa [#allocation4], 0
    // Predicated region
    $region2: #{tpu_custom_call.1} parent=1 // pred_check
      _
    $region3: #{tpu_custom_call.1} parent=1 // pred_check_branch
      %11 = sbr.rel (0) target = $region5
    $region4: #{tpu_custom_call.1} parent=1 // pred_region
      %s13 = ssub.s32 128, 128
      %14 = vsyncadd [#allocation3], %s13
      %s16 = sshll.u32 [#allocation2], 4
      %s17 = int_to_ptr.vmem [resolvable:$true] %s16
      %19 = dma.hbm_to_vmem [thread:$0]  %s0, 128, %s17, [#allocation3]
    $region5: #{tpu_custom_call.1} parent=1 // pred_fallthru
      _
    // Predicated region
    $region6: #{tpu_custom_call.1} parent=1 // pred_check
      _
    $region7: #{tpu_custom_call.1} parent=1 // pred_check_branch
      %21 = sbr.rel (0) target = $region9
    $region8: #{tpu_custom_call.1} parent=1 // pred_region
      %s23 = ssub.s32 128, 128
      %24 = vsyncadd [#allocation6], %s23
      %s26 = sshll.u32 [#allocation5], 4
      %s27 = int_to_ptr.vmem [resolvable:$true] %s26
      %29 = dma.hbm_to_vmem [thread:$0]  %s1, 128, %s27, [#allocation6]
    $region9: #{tpu_custom_call.1} parent=1 // pred_fallthru
      _
    // Predicated region
    $region10: #{tpu_custom_call.1} parent=1 // pred_check
      _
    $region11: #{tpu_custom_call.1} parent=1 // pred_check_branch
      %31 = sbr.rel (0) target = $region13
    $region12: #{tpu_custom_call.1} parent=1 // pred_region
      %32 = dma.done [#allocation3], 128
    $region13: #{tpu_custom_call.1} parent=1 // pred_fallthru
      _
    // Predicated region
    $region14: #{tpu_custom_call.1} parent=1 // pred_check
      _
    $region15: #{tpu_custom_call.1} parent=1 // pred_check_branch
      %34 = sbr.rel (0) target = $region17
    $region16: #{tpu_custom_call.1} parent=1 // pred_region
      %35 = dma.done [#allocation6], 128
    $region17: #{tpu_custom_call.1} parent=1 // pred_fallthru
      _
    %v36 = vld [vmem:[#allocation2] sm:$0xff]
    %v37 = vld [vmem:[#allocation5] sm:$0xff]
    %v38 = vlaneseq
    %v39 = vand.u32 %v38, 127
    %vm40 = vcmask 261120
    %v41 = vsel %vm40, %v37, -inf
    %42 = vmax.xlane.f32.xlu0 %v41
    %v43 = vpop.xlane.xlu0 %42
    %vm44 = vcmp.eq.f32.partialorder %v37, %v43
    %v45 = vsel %vm44, %v39, 32
    %v46 = vsel %vm40, %v45, 2147483647
    %v47 = vand.u32 %v46, 65535
    %v48 = vshra.s32 %v46, 16
    %v49 = vcvt.s32.f32 %v47
    %v50 = vcvt.s32.f32 %v48
    %51 = vmin.xlane.f32.xlu0 %v50
    %v52 = vpop.xlane.xlu0 %51
    %vm53 = vcmp.eq.f32.partialorder %v50, %v52
    %v54 = vsel %vm53, %v49, inf
    %55 = vmin.xlane.f32.xlu0 %v54
    %v56 = vpop.xlane.xlu0 %55
    %v57 = vcvt.f32.s32 %v56
    %v58 = vcvt.f32.s32 %v52
    %v59 = vshll.u32 %v58, 16
    %v60 = vadd.s32 %v59, %v57
    %v61 = vsel %vm40, %v36, -inf
    %62 = vmax.xlane.f32.xlu0 %v61
    %v63 = vpop.xlane.xlu0 %62
    %v64 = vsub.f32 %v36, %v63
    %v65 = vmul.f32 %v64, 1.442695
    %v66 = vpow.pop %v65
    %v67 = vsel %vm40, %v66, 0.0
    %68 = vadd.xlane.f32.xlu0 %v67
    %v69 = vpop.xlane.xlu0 %68
    %v70 = vlog2.pop %v69
    %v71 = vmul.f32 %v70, 0.6931472
    %v72 = vadd.f32 %v71, %v63
    %vm73 = vcmp.eq.s32.totalorder %v45, %v60
    %v74 = vsel %vm73, %v36, 0.0
    %v75 = vsel %vm40, %v74, 0.0
    %76 = vadd.xlane.f32.xlu0 %v75
    %v77 = vpop.xlane.xlu0 %76
    %v78 = vsub.f32 %v72, %v77
    %s79 = smul.u32 0, 8
    %v80 = vlaneseq
    %v81 = vshrl.u32 %v80, 7
    %v82 = vstv %s79
    %v83 = vadd.s32 %v82, %v81
    %vm84 = vcmp.lt.s32.totalorder %v83, 8
    %v85 = vsel %vm84, %v78, 0.0
    %vm86 = vcmask 7168
    %v87 = vsel %vm86, %v85, 0.0
    %88 = vadd.xlane.f32.xlu0 %v87
    %v89 = vpop.xlane.xlu0 %88
    %v90 = vrot.slane %v89, 4
    %v91 = vadd.f32 %v89, %v90
    %v92 = vrot.slane %v91, 2
    %v93 = vadd.f32 %v91, %v92
    %v94 = vrot.slane %v93, 1
    %v95 = vadd.f32 %v93, %v94
    %s96 = vtos %v95
    %v97 = vstv %s96
    %98 = vst [vmem:[#allocation7] sm:$0xff] %v97
    // Predicated region
    $region18: #{tpu_custom_call.1} parent=1 // pred_check
      _
    $region19: #{tpu_custom_call.1} parent=1 // pred_check_branch
      %100 = sbr.rel (0) target = $region21
    $region20: #{tpu_custom_call.1} parent=1 // pred_region
      %s102 = ssub.s32 128, 128
      %103 = vsyncadd [#allocation4], %s102
      %s105 = sshll.u32 [#allocation7], 4
      %s106 = int_to_ptr.vmem [resolvable:$true] %s105
      %108 = dma.vmem_to_hbm [thread:$0]  %s106, 128, %s2, [#allocation4]
    $region21: #{tpu_custom_call.1} parent=1 // pred_fallthru
      _
    // Predicated region
    $region22: #{tpu_custom_call.1} parent=1 // pred_check
      _
    $region23: #{tpu_custom_call.1} parent=1 // pred_check_branch
      %110 = sbr.rel (0) target = $region25
    $region24: #{tpu_custom_call.1} parent=1 // pred_region
      %111 = dma.done [#allocation4], 128
    $region25: #{tpu_custom_call.1} parent=1 // pred_fallthru
      _
    %112 = vsyncpa [#allocation3], 1
    %113 = vsyncpa [#allocation6], 1
    %114 = vsyncpa [#allocation4], 1

</llo_original>
